<compile_context>
chip_gen: v7x
topology: tpu7x:2x2x1
jax: 0.10.0
libtpu: 0.0.40
codegen_flags: <defaults>
</compile_context>

<pallas_src>
import functools

import jax
import jax.numpy as jnp
from jax import lax
from jax.experimental import pallas as pl
from jax.experimental.pallas import tpu as pltpu

SUBLANE = 8  # TPU sublane width


def plstm_kernel(xf_ref, wih_ref, whh_ref, b_ref, wfc_ref, bfc_ref,
                 out_ref, gx_ref, *, seq_len):
    """xf_ref : [T*PB, F]   time-major x, batch padded to PB (multiple of 8)
       wih_ref: [F, 4H]     W_ih^T
       whh_ref: [H, 4H]     W_hh^T
       b_ref  : [1, 4H]     b_ih + b_hh
       wfc_ref: [1, H]      fc weight row
       bfc_ref: [1, 1]      fc bias
       out_ref: [B, 1]      prediction
       gx_ref : [T*PB, 4H]  VMEM scratch for the hoisted gate projection."""
    T = seq_len
    PB = xf_ref.shape[0] // T
    H = whh_ref.shape[0]
    B = out_ref.shape[0]

    # Hoisted input projection + bias: ONE MXU matmul for the whole sequence,
    # parked in VMEM so per-step reads are bounded, 8-aligned (8,128) slabs.
    gx_ref[...] = (jnp.dot(xf_ref[...], wih_ref[...],
                           preferred_element_type=jnp.float32)
                   + b_ref[...])                                  # [T*PB, 4H]

    whh = whh_ref[...]                                            # [H, 4H]

    def activations(gates):
        # Two full-vreg EUP passes (sigmoid + tanh) instead of four per-gate
        # pushes; gates are picked out by static lane slices (i, f, g, o).
        sig = jax.nn.sigmoid(gates)
        th = jnp.tanh(gates)
        return (sig[:, 0 * H:1 * H], sig[:, 1 * H:2 * H],
                th[:, 2 * H:3 * H], sig[:, 3 * H:4 * H])

    # Peeled t = 0: h0 = c0 = 0 => gates == g_x[0]; no MXU push, no f*c FMA.
    i_g, _, g_g, o_g = activations(gx_ref[0:PB, :])
    c = i_g * g_g
    h = o_g * jnp.tanh(c)

    # Statically unrolled recurrence (small fixed trip count gives the LLO
    # scheduler full cross-iteration visibility). One MXU dot per step.
    for t in range(1, T):
        g_x = gx_ref[t * PB:(t + 1) * PB, :]                      # 8-aligned
        gates = jnp.dot(h, whh, preferred_element_type=jnp.float32) + g_x
        i_g, f_g, g_g, o_g = activations(gates)
        c = f_g * c + i_g * g_g
        h = o_g * jnp.tanh(c)

    # Dropout on h is identity at inference time (eval mode).
    # Final FC (out_features=1) as VPU multiply + XLU lane reduction — avoids
    # an N=1 MXU push/pop at the tail of the serial chain.
    pred = (jnp.sum(h * wfc_ref[...], axis=-1, keepdims=True)
            + bfc_ref[...])                                       # [PB, 1]
    out_ref[...] = pred[:B, :]


def prepare_params(w_ih, w_hh, b_ih, b_hh, w_fc, b_fc):
    """One-time parameter prep — run at model-load time, NOT per forward."""
    H = w_hh.shape[1]
    return dict(
        wih_t=jnp.asarray(w_ih, jnp.float32).T,                   # [F, 4H]
        whh_t=jnp.asarray(w_hh, jnp.float32).T,                   # [H, 4H]
        b_all=jnp.asarray(b_ih + b_hh, jnp.float32).reshape(1, 4 * H),
        wfc=jnp.asarray(w_fc, jnp.float32).reshape(1, H),
        bfc=jnp.asarray(b_fc, jnp.float32).reshape(1, 1),
    )


@jax.jit
def plstm_forward(x, params):
    """x: [B, T, F] (batch_first, like the PyTorch module).  Returns [B, 1]."""
    B, T, F = x.shape
    H = params["whh_t"].shape[0]
    PB = ((B + SUBLANE - 1) // SUBLANE) * SUBLANE

    # Time-major + sublane-pad the batch.  Under jit this is a single copy
    # fusion in front of the pallas_call; all weight prep lives in
    # prepare_params, outside the hot path.
    x_t = jnp.transpose(x, (1, 0, 2)).astype(jnp.float32)         # [T, B, F]
    x_pad = jnp.pad(x_t, ((0, 0), (0, PB - B), (0, 0)))           # [T, PB, F]
    x_flat = x_pad.reshape(T * PB, F)                             # [T*PB, F]

    vmem = pl.BlockSpec(memory_space=pltpu.MemorySpace.VMEM)
    kernel = functools.partial(plstm_kernel, seq_len=T)
    return pl.pallas_call(
        kernel,
        out_shape=jax.ShapeDtypeStruct((B, 1), jnp.float32),
        in_specs=[vmem] * 6,
        out_specs=vmem,
        scratch_shapes=[pltpu.VMEM((T * PB, 4 * H), jnp.float32)],
    )(x_flat, params["wih_t"], params["whh_t"], params["b_all"],
      params["wfc"], params["bfc"])


def reference_forward(x, w_ih, w_hh, b_ih, b_hh, w_fc, b_fc):
    """Plain-JAX reference reproducing torch.nn.LSTM + Linear semantics."""
    B, T, F = x.shape
    H = w_hh.shape[1]

    def step(carry, x_t):
        h, c = carry
        gates = x_t @ w_ih.T + b_ih + h @ w_hh.T + b_hh
        i_g = jax.nn.sigmoid(gates[:, 0 * H:1 * H])
        f_g = jax.nn.sigmoid(gates[:, 1 * H:2 * H])
        g_g = jnp.tanh(gates[:, 2 * H:3 * H])
        o_g = jax.nn.sigmoid(gates[:, 3 * H:4 * H])
        c_new = f_g * c + i_g * g_g
        h_new = o_g * jnp.tanh(c_new)
        return (h_new, c_new), None

    h0 = jnp.zeros((B, H), jnp.float32)
    c0 = jnp.zeros((B, H), jnp.float32)
    (h_n, _), _ = lax.scan(step, (h0, c0), jnp.transpose(x, (1, 0, 2)))
    return h_n @ w_fc.T + b_fc


if __name__ == "__main__":
    # Small shapes consistent with the module: ip_size=6 features, hidden=32.
    B, T, F, H = 2, 8, 6, 32

    key = jax.random.PRNGKey(0)
    k_x, k1, k2, k3, k4, k5, k6 = jax.random.split(key, 7)

    # Deterministic PyTorch-style uniform(-1/sqrt(H), 1/sqrt(H)) init.
    bound = 1.0 / jnp.sqrt(jnp.float32(H))
    w_ih = jax.random.uniform(k1, (4 * H, F), jnp.float32, -bound, bound)
    w_hh = jax.random.uniform(k2, (4 * H, H), jnp.float32, -bound, bound)
    b_ih = jax.random.uniform(k3, (4 * H,), jnp.float32, -bound, bound)
    b_hh = jax.random.uniform(k4, (4 * H,), jnp.float32, -bound, bound)
    w_fc = jax.random.uniform(k5, (1, H), jnp.float32, -bound, bound)
    b_fc = jax.random.uniform(k6, (1,), jnp.float32, -bound, bound)

    x = jax.random.normal(k_x, (B, T, F), jnp.float32)

    params = prepare_params(w_ih, w_hh, b_ih, b_hh, w_fc, b_fc)  # one-time
    pred = plstm_forward(x, params)
    pred = jax.block_until_ready(pred)

    ref = reference_forward(x, w_ih, w_hh, b_ih, b_hh, w_fc, b_fc)
    assert pred.shape == (B, 1), pred.shape
    assert jnp.allclose(pred, ref, atol=1e-5, rtol=1e-5), (pred, ref)

    print("KERNEL_OK")
</pallas_src>

<mosaic_0001>
module attributes {stable_mosaic.version = 11 : i64} {
  func.func @plstm_kernel(%arg0: memref<64x6xf32, #tpu.memory_space<vmem>>, %arg1: memref<6x128xf32, #tpu.memory_space<vmem>>, %arg2: memref<32x128xf32, #tpu.memory_space<vmem>>, %arg3: memref<1x128xf32, #tpu.memory_space<vmem>>, %arg4: memref<1x32xf32, #tpu.memory_space<vmem>>, %arg5: memref<1x1xf32, #tpu.memory_space<vmem>>, %arg6: memref<2x1xf32, #tpu.memory_space<vmem>>, %arg7: memref<64x128xf32, #tpu.memory_space<vmem>>) attributes {dimension_semantics = [], scalar_prefetch = 0 : i64, scratch_operands = 1 : i64, tpu.core_type = #tpu.core_type<tc>} {
    %c0 = arith.constant 0 : index
    %c0_0 = arith.constant 0 : index
    %0 = vector.load %arg0[%c0, %c0_0] : memref<64x6xf32, #tpu.memory_space<vmem>>, vector<64x6xf32>
    %c0_1 = arith.constant 0 : index
    %c0_2 = arith.constant 0 : index
    %1 = vector.load %arg1[%c0_1, %c0_2] : memref<6x128xf32, #tpu.memory_space<vmem>>, vector<6x128xf32>
    %cst = arith.constant dense<0.000000e+00> : vector<64x128xf32>
    %2 = tpu.matmul %0, %1, %cst {dimension_numbers = #tpu.dot_dimension_numbers<[1], [0], [0], [1], [0, 0, 1, 1], [], []>} : vector<64x6xf32>, vector<6x128xf32>, vector<64x128xf32> -> vector<64x128xf32>
    %c0_3 = arith.constant 0 : index
    %c0_4 = arith.constant 0 : index
    %3 = vector.load %arg3[%c0_3, %c0_4] : memref<1x128xf32, #tpu.memory_space<vmem>>, vector<1x128xf32>
    %4 = vector.broadcast %3 : vector<1x128xf32> to vector<64x128xf32>
    %5 = arith.addf %2, %4 : vector<64x128xf32>
    %c0_5 = arith.constant 0 : index
    %c0_6 = arith.constant 0 : index
    %6 = vector.load %arg7[%c0_5, %c0_6] : memref<64x128xf32, #tpu.memory_space<vmem>>, vector<64x128xf32>
    tpu.vector_store %arg7[%c0_5, %c0_6], %5 {strides = array<i32>} : memref<64x128xf32, #tpu.memory_space<vmem>>, vector<64x128xf32>,
    %c0_7 = arith.constant 0 : index
    %c0_8 = arith.constant 0 : index
    %7 = vector.load %arg2[%c0_7, %c0_8] : memref<32x128xf32, #tpu.memory_space<vmem>>, vector<32x128xf32>
    %c0_9 = arith.constant 0 : index
    %c0_10 = arith.constant 0 : index
    %8 = vector.load %arg7[%c0_9, %c0_10] : memref<64x128xf32, #tpu.memory_space<vmem>>, vector<8x128xf32>
    %9 = arith.negf %8 : vector<8x128xf32>
    %10 = math.exp %9 : vector<8x128xf32>
    %cst_11 = arith.constant 1.000000e+00 : f32
    %11 = vector.broadcast %cst_11 : f32 to vector<8x128xf32>
    %12 = arith.addf %11, %10 : vector<8x128xf32>
    %13 = arith.divf %11, %12 : vector<8x128xf32>
    %14 = math.tanh %8 : vector<8x128xf32>
    %15 = vector.extract_strided_slice %13 {offsets = [0, 0], sizes = [8, 32], strides = [1, 1]} : vector<8x128xf32> to vector<8x32xf32>
    %16 = vector.extract_strided_slice %14 {offsets = [0, 64], sizes = [8, 32], strides = [1, 1]} : vector<8x128xf32> to vector<8x32xf32>
    %17 = vector.extract_strided_slice %13 {offsets = [0, 96], sizes = [8, 32], strides = [1, 1]} : vector<8x128xf32> to vector<8x32xf32>
    %18 = arith.mulf %15, %16 : vector<8x32xf32>
    %19 = math.tanh %18 : vector<8x32xf32>
    %20 = arith.mulf %17, %19 : vector<8x32xf32>
    %c8 = arith.constant 8 : index
    %c0_12 = arith.constant 0 : index
    %21 = vector.load %arg7[%c8, %c0_12] : memref<64x128xf32, #tpu.memory_space<vmem>>, vector<8x128xf32>
    %cst_13 = arith.constant dense<0.000000e+00> : vector<8x128xf32>
    %22 = tpu.matmul %20, %7, %cst_13 {dimension_numbers = #tpu.dot_dimension_numbers<[1], [0], [0], [1], [0, 0, 1, 1], [], []>} : vector<8x32xf32>, vector<32x128xf32>, vector<8x128xf32> -> vector<8x128xf32>
    %23 = arith.addf %22, %21 : vector<8x128xf32>
    %24 = arith.negf %23 : vector<8x128xf32>
    %25 = math.exp %24 : vector<8x128xf32>
    %cst_14 = arith.constant 1.000000e+00 : f32
    %26 = vector.broadcast %cst_14 : f32 to vector<8x128xf32>
    %27 = arith.addf %26, %25 : vector<8x128xf32>
    %28 = arith.divf %26, %27 : vector<8x128xf32>
    %29 = math.tanh %23 : vector<8x128xf32>
    %30 = vector.extract_strided_slice %28 {offsets = [0, 0], sizes = [8, 32], strides = [1, 1]} : vector<8x128xf32> to vector<8x32xf32>
    %31 = vector.extract_strided_slice %28 {offsets = [0, 32], sizes = [8, 32], strides = [1, 1]} : vector<8x128xf32> to vector<8x32xf32>
    %32 = vector.extract_strided_slice %29 {offsets = [0, 64], sizes = [8, 32], strides = [1, 1]} : vector<8x128xf32> to vector<8x32xf32>
    %33 = vector.extract_strided_slice %28 {offsets = [0, 96], sizes = [8, 32], strides = [1, 1]} : vector<8x128xf32> to vector<8x32xf32>
    %34 = arith.mulf %31, %18 : vector<8x32xf32>
    %35 = arith.mulf %30, %32 : vector<8x32xf32>
    %36 = arith.addf %34, %35 : vector<8x32xf32>
    %37 = math.tanh %36 : vector<8x32xf32>
    %38 = arith.mulf %33, %37 : vector<8x32xf32>
    %c16 = arith.constant 16 : index
    %c0_15 = arith.constant 0 : index
    %39 = vector.load %arg7[%c16, %c0_15] : memref<64x128xf32, #tpu.memory_space<vmem>>, vector<8x128xf32>
    %cst_16 = arith.constant dense<0.000000e+00> : vector<8x128xf32>
    %40 = tpu.matmul %38, %7, %cst_16 {dimension_numbers = #tpu.dot_dimension_numbers<[1], [0], [0], [1], [0, 0, 1, 1], [], []>} : vector<8x32xf32>, vector<32x128xf32>, vector<8x128xf32> -> vector<8x128xf32>
    %41 = arith.addf %40, %39 : vector<8x128xf32>
    %42 = arith.negf %41 : vector<8x128xf32>
    %43 = math.exp %42 : vector<8x128xf32>
    %cst_17 = arith.constant 1.000000e+00 : f32
    %44 = vector.broadcast %cst_17 : f32 to vector<8x128xf32>
    %45 = arith.addf %44, %43 : vector<8x128xf32>
    %46 = arith.divf %44, %45 : vector<8x128xf32>
    %47 = math.tanh %41 : vector<8x128xf32>
    %48 = vector.extract_strided_slice %46 {offsets = [0, 0], sizes = [8, 32], strides = [1, 1]} : vector<8x128xf32> to vector<8x32xf32>
    %49 = vector.extract_strided_slice %46 {offsets = [0, 32], sizes = [8, 32], strides = [1, 1]} : vector<8x128xf32> to vector<8x32xf32>
    %50 = vector.extract_strided_slice %47 {offsets = [0, 64], sizes = [8, 32], strides = [1, 1]} : vector<8x128xf32> to vector<8x32xf32>
    %51 = vector.extract_strided_slice %46 {offsets = [0, 96], sizes = [8, 32], strides = [1, 1]} : vector<8x128xf32> to vector<8x32xf32>
    %52 = arith.mulf %49, %36 : vector<8x32xf32>
    %53 = arith.mulf %48, %50 : vector<8x32xf32>
    %54 = arith.addf %52, %53 : vector<8x32xf32>
    %55 = math.tanh %54 : vector<8x32xf32>
    %56 = arith.mulf %51, %55 : vector<8x32xf32>
    %c24 = arith.constant 24 : index
    %c0_18 = arith.constant 0 : index
    %57 = vector.load %arg7[%c24, %c0_18] : memref<64x128xf32, #tpu.memory_space<vmem>>, vector<8x128xf32>
    %cst_19 = arith.constant dense<0.000000e+00> : vector<8x128xf32>
    %58 = tpu.matmul %56, %7, %cst_19 {dimension_numbers = #tpu.dot_dimension_numbers<[1], [0], [0], [1], [0, 0, 1, 1], [], []>} : vector<8x32xf32>, vector<32x128xf32>, vector<8x128xf32> -> vector<8x128xf32>
    %59 = arith.addf %58, %57 : vector<8x128xf32>
    %60 = arith.negf %59 : vector<8x128xf32>
    %61 = math.exp %60 : vector<8x128xf32>
    %cst_20 = arith.constant 1.000000e+00 : f32
    %62 = vector.broadcast %cst_20 : f32 to vector<8x128xf32>
    %63 = arith.addf %62, %61 : vector<8x128xf32>
    %64 = arith.divf %62, %63 : vector<8x128xf32>
    %65 = math.tanh %59 : vector<8x128xf32>
    %66 = vector.extract_strided_slice %64 {offsets = [0, 0], sizes = [8, 32], strides = [1, 1]} : vector<8x128xf32> to vector<8x32xf32>
    %67 = vector.extract_strided_slice %64 {offsets = [0, 32], sizes = [8, 32], strides = [1, 1]} : vector<8x128xf32> to vector<8x32xf32>
    %68 = vector.extract_strided_slice %65 {offsets = [0, 64], sizes = [8, 32], strides = [1, 1]} : vector<8x128xf32> to vector<8x32xf32>
    %69 = vector.extract_strided_slice %64 {offsets = [0, 96], sizes = [8, 32], strides = [1, 1]} : vector<8x128xf32> to vector<8x32xf32>
    %70 = arith.mulf %67, %54 : vector<8x32xf32>
    %71 = arith.mulf %66, %68 : vector<8x32xf32>
    %72 = arith.addf %70, %71 : vector<8x32xf32>
    %73 = math.tanh %72 : vector<8x32xf32>
    %74 = arith.mulf %69, %73 : vector<8x32xf32>
    %c32 = arith.constant 32 : index
    %c0_21 = arith.constant 0 : index
    %75 = vector.load %arg7[%c32, %c0_21] : memref<64x128xf32, #tpu.memory_space<vmem>>, vector<8x128xf32>
    %cst_22 = arith.constant dense<0.000000e+00> : vector<8x128xf32>
    %76 = tpu.matmul %74, %7, %cst_22 {dimension_numbers = #tpu.dot_dimension_numbers<[1], [0], [0], [1], [0, 0, 1, 1], [], []>} : vector<8x32xf32>, vector<32x128xf32>, vector<8x128xf32> -> vector<8x128xf32>
    %77 = arith.addf %76, %75 : vector<8x128xf32>
    %78 = arith.negf %77 : vector<8x128xf32>
    %79 = math.exp %78 : vector<8x128xf32>
    %cst_23 = arith.constant 1.000000e+00 : f32
    %80 = vector.broadcast %cst_23 : f32 to vector<8x128xf32>
    %81 = arith.addf %80, %79 : vector<8x128xf32>
    %82 = arith.divf %80, %81 : vector<8x128xf32>
    %83 = math.tanh %77 : vector<8x128xf32>
    %84 = vector.extract_strided_slice %82 {offsets = [0, 0], sizes = [8, 32], strides = [1, 1]} : vector<8x128xf32> to vector<8x32xf32>
    %85 = vector.extract_strided_slice %82 {offsets = [0, 32], sizes = [8, 32], strides = [1, 1]} : vector<8x128xf32> to vector<8x32xf32>
    %86 = vector.extract_strided_slice %83 {offsets = [0, 64], sizes = [8, 32], strides = [1, 1]} : vector<8x128xf32> to vector<8x32xf32>
    %87 = vector.extract_strided_slice %82 {offsets = [0, 96], sizes = [8, 32], strides = [1, 1]} : vector<8x128xf32> to vector<8x32xf32>
    %88 = arith.mulf %85, %72 : vector<8x32xf32>
    %89 = arith.mulf %84, %86 : vector<8x32xf32>
    %90 = arith.addf %88, %89 : vector<8x32xf32>
    %91 = math.tanh %90 : vector<8x32xf32>
    %92 = arith.mulf %87, %91 : vector<8x32xf32>
    %c40 = arith.constant 40 : index
    %c0_24 = arith.constant 0 : index
    %93 = vector.load %arg7[%c40, %c0_24] : memref<64x128xf32, #tpu.memory_space<vmem>>, vector<8x128xf32>
    %cst_25 = arith.constant dense<0.000000e+00> : vector<8x128xf32>
    %94 = tpu.matmul %92, %7, %cst_25 {dimension_numbers = #tpu.dot_dimension_numbers<[1], [0], [0], [1], [0, 0, 1, 1], [], []>} : vector<8x32xf32>, vector<32x128xf32>, vector<8x128xf32> -> vector<8x128xf32>
    %95 = arith.addf %94, %93 : vector<8x128xf32>
    %96 = arith.negf %95 : vector<8x128xf32>
    %97 = math.exp %96 : vector<8x128xf32>
    %cst_26 = arith.constant 1.000000e+00 : f32
    %98 = vector.broadcast %cst_26 : f32 to vector<8x128xf32>
    %99 = arith.addf %98, %97 : vector<8x128xf32>
    %100 = arith.divf %98, %99 : vector<8x128xf32>
    %101 = math.tanh %95 : vector<8x128xf32>
    %102 = vector.extract_strided_slice %100 {offsets = [0, 0], sizes = [8, 32], strides = [1, 1]} : vector<8x128xf32> to vector<8x32xf32>
    %103 = vector.extract_strided_slice %100 {offsets = [0, 32], sizes = [8, 32], strides = [1, 1]} : vector<8x128xf32> to vector<8x32xf32>
    %104 = vector.extract_strided_slice %101 {offsets = [0, 64], sizes = [8, 32], strides = [1, 1]} : vector<8x128xf32> to vector<8x32xf32>
    %105 = vector.extract_strided_slice %100 {offsets = [0, 96], sizes = [8, 32], strides = [1, 1]} : vector<8x128xf32> to vector<8x32xf32>
    %106 = arith.mulf %103, %90 : vector<8x32xf32>
    %107 = arith.mulf %102, %104 : vector<8x32xf32>
    %108 = arith.addf %106, %107 : vector<8x32xf32>
    %109 = math.tanh %108 : vector<8x32xf32>
    %110 = arith.mulf %105, %109 : vector<8x32xf32>
    %c48 = arith.constant 48 : index
    %c0_27 = arith.constant 0 : index
    %111 = vector.load %arg7[%c48, %c0_27] : memref<64x128xf32, #tpu.memory_space<vmem>>, vector<8x128xf32>
    %cst_28 = arith.constant dense<0.000000e+00> : vector<8x128xf32>
    %112 = tpu.matmul %110, %7, %cst_28 {dimension_numbers = #tpu.dot_dimension_numbers<[1], [0], [0], [1], [0, 0, 1, 1], [], []>} : vector<8x32xf32>, vector<32x128xf32>, vector<8x128xf32> -> vector<8x128xf32>
    %113 = arith.addf %112, %111 : vector<8x128xf32>
    %114 = arith.negf %113 : vector<8x128xf32>
    %115 = math.exp %114 : vector<8x128xf32>
    %cst_29 = arith.constant 1.000000e+00 : f32
    %116 = vector.broadcast %cst_29 : f32 to vector<8x128xf32>
    %117 = arith.addf %116, %115 : vector<8x128xf32>
    %118 = arith.divf %116, %117 : vector<8x128xf32>
    %119 = math.tanh %113 : vector<8x128xf32>
    %120 = vector.extract_strided_slice %118 {offsets = [0, 0], sizes = [8, 32], strides = [1, 1]} : vector<8x128xf32> to vector<8x32xf32>
    %121 = vector.extract_strided_slice %118 {offsets = [0, 32], sizes = [8, 32], strides = [1, 1]} : vector<8x128xf32> to vector<8x32xf32>
    %122 = vector.extract_strided_slice %119 {offsets = [0, 64], sizes = [8, 32], strides = [1, 1]} : vector<8x128xf32> to vector<8x32xf32>
    %123 = vector.extract_strided_slice %118 {offsets = [0, 96], sizes = [8, 32], strides = [1, 1]} : vector<8x128xf32> to vector<8x32xf32>
    %124 = arith.mulf %121, %108 : vector<8x32xf32>
    %125 = arith.mulf %120, %122 : vector<8x32xf32>
    %126 = arith.addf %124, %125 : vector<8x32xf32>
    %127 = math.tanh %126 : vector<8x32xf32>
    %128 = arith.mulf %123, %127 : vector<8x32xf32>
    %c56 = arith.constant 56 : index
    %c0_30 = arith.constant 0 : index
    %129 = vector.load %arg7[%c56, %c0_30] : memref<64x128xf32, #tpu.memory_space<vmem>>, vector<8x128xf32>
    %cst_31 = arith.constant dense<0.000000e+00> : vector<8x128xf32>
    %130 = tpu.matmul %128, %7, %cst_31 {dimension_numbers = #tpu.dot_dimension_numbers<[1], [0], [0], [1], [0, 0, 1, 1], [], []>} : vector<8x32xf32>, vector<32x128xf32>, vector<8x128xf32> -> vector<8x128xf32>
    %131 = arith.addf %130, %129 : vector<8x128xf32>
    %132 = arith.negf %131 : vector<8x128xf32>
    %133 = math.exp %132 : vector<8x128xf32>
    %cst_32 = arith.constant 1.000000e+00 : f32
    %134 = vector.broadcast %cst_32 : f32 to vector<8x128xf32>
    %135 = arith.addf %134, %133 : vector<8x128xf32>
    %136 = arith.divf %134, %135 : vector<8x128xf32>
    %137 = math.tanh %131 : vector<8x128xf32>
    %138 = vector.extract_strided_slice %136 {offsets = [0, 0], sizes = [8, 32], strides = [1, 1]} : vector<8x128xf32> to vector<8x32xf32>
    %139 = vector.extract_strided_slice %136 {offsets = [0, 32], sizes = [8, 32], strides = [1, 1]} : vector<8x128xf32> to vector<8x32xf32>
    %140 = vector.extract_strided_slice %137 {offsets = [0, 64], sizes = [8, 32], strides = [1, 1]} : vector<8x128xf32> to vector<8x32xf32>
    %141 = vector.extract_strided_slice %136 {offsets = [0, 96], sizes = [8, 32], strides = [1, 1]} : vector<8x128xf32> to vector<8x32xf32>
    %142 = arith.mulf %139, %126 : vector<8x32xf32>
    %143 = arith.mulf %138, %140 : vector<8x32xf32>
    %144 = arith.addf %142, %143 : vector<8x32xf32>
    %145 = math.tanh %144 : vector<8x32xf32>
    %146 = arith.mulf %141, %145 : vector<8x32xf32>
    %c0_33 = arith.constant 0 : index
    %c0_34 = arith.constant 0 : index
    %147 = vector.load %arg4[%c0_33, %c0_34] : memref<1x32xf32, #tpu.memory_space<vmem>>, vector<1x32xf32>
    %148 = vector.broadcast %147 : vector<1x32xf32> to vector<8x32xf32>
    %149 = arith.mulf %146, %148 : vector<8x32xf32>
    %cst_35 = arith.constant dense<0.000000e+00> : vector<8xf32>
    %150 = vector.multi_reduction <add>, %149, %cst_35 [1] : vector<8x32xf32> to vector<8xf32>
    %151 = vector.shape_cast %150 : vector<8xf32> to vector<8x1xf32>
    %c0_36 = arith.constant 0 : index
    %c0_37 = arith.constant 0 : index
    %152 = vector.load %arg5[%c0_36, %c0_37] : memref<1x1xf32, #tpu.memory_space<vmem>>, vector<1x1xf32>
    %153 = vector.broadcast %152 : vector<1x1xf32> to vector<8x1xf32>
    %154 = arith.addf %151, %153 : vector<8x1xf32>
    %155 = vector.extract_strided_slice %154 {offsets = [0, 0], sizes = [2, 1], strides = [1, 1]} : vector<8x1xf32> to vector<2x1xf32>
    %c0_38 = arith.constant 0 : index
    %c0_39 = arith.constant 0 : index
    %156 = vector.load %arg6[%c0_38, %c0_39] : memref<2x1xf32, #tpu.memory_space<vmem>>, vector<2x1xf32>
    tpu.vector_store %arg6[%c0_38, %c0_39], %155 {strides = array<i32>} : memref<2x1xf32, #tpu.memory_space<vmem>>, vector<2x1xf32>,
    return
  }
}

</mosaic_0001>

<llo_original>
// kernel: plstm_forward.1
$region0: #{plstm_forward.1}
  #allocation0 [shape = 'u32[]', space=smem, size = 0x4, offset = 0x4, fixed_abs, tag = 'smem constant byte address 0x4 - core index']
  #allocation1 [shape = 'u32[144,128]{1,0:T(1,128)}', space=vmem, size = 0x12000, scoped, tag = 'internal scratch']
  #allocation2 [shape = 'f32[64,128]{1,0:T(8,128)}', space=vmem, size = 0x8000, scoped, tag = 'scratch operand']
  #allocation3 [shape = 'f32[1,1]{1,0:T(1,128)S(1)}', space=vmem, size = 0x200, scoped, tag = 'scoped memory for plstm_forward.1']
  %s0 = inlined_call_operand.vmem [shape: f32[64,6], index: 0, kind: input, shape index: {}]
  %s1 = inlined_call_operand.vmem [shape: f32[6,128], index: 1, kind: input, shape index: {}]
  %s2 = inlined_call_operand.vmem [shape: f32[32,128], index: 2, kind: input, shape index: {}]
  %s3 = inlined_call_operand.vmem [shape: f32[1,128], index: 3, kind: input, shape index: {}]
  %s4 = inlined_call_operand.vmem [shape: f32[1,32], index: 4, kind: input, shape index: {}]
  %s5 = inlined_call_operand.<no memory space> [shape: f32[1,1], index: 5, kind: input, shape index: {}]
  %s6 = inlined_call_operand.vmem [shape: f32[2,1], index: 6, kind: output, shape index: {}]
  %s7 = sld [smem:[#allocation0]]
  $region34: #{plstm_forward.1} parent=0
    _
  %s9 = ssub.s32 1, %s7
  %s10 = scalar_select 0, %s9, %s7
  %v11 = vstv %s5
  %12 = vst [vmem:[#allocation3] sm:$0x1] %v11
  // Predicated region
  $region2: #{plstm_forward.1} parent=0 // pred_check
    _
  $region3: #{plstm_forward.1} parent=0 // pred_check_branch
    %14 = sbr.rel (0) target = $region5
  $region4: #{plstm_forward.1} parent=0 // pred_region
    _
  $region5: #{plstm_forward.1} parent=0 // pred_fallthru
    _
  // Predicated region
  $region6: #{plstm_forward.1} parent=0 // pred_check
    _
  $region7: #{plstm_forward.1} parent=0 // pred_check_branch
    %16 = sbr.rel (0) target = $region9
  $region8: #{plstm_forward.1} parent=0 // pred_region
    _
  $region9: #{plstm_forward.1} parent=0 // pred_fallthru
    _
  // Predicated region
  $region10: #{plstm_forward.1} parent=0 // pred_check
    _
  $region11: #{plstm_forward.1} parent=0 // pred_check_branch
    %18 = sbr.rel (0) target = $region13
  $region12: #{plstm_forward.1} parent=0 // pred_region
    _
  $region13: #{plstm_forward.1} parent=0 // pred_fallthru
    _
  // Predicated region
  $region14: #{plstm_forward.1} parent=0 // pred_check
    _
  $region15: #{plstm_forward.1} parent=0 // pred_check_branch
    %20 = sbr.rel (0) target = $region17
  $region16: #{plstm_forward.1} parent=0 // pred_region
    _
  $region17: #{plstm_forward.1} parent=0 // pred_fallthru
    _
  // Predicated region
  $region18: #{plstm_forward.1} parent=0 // pred_check
    _
  $region19: #{plstm_forward.1} parent=0 // pred_check_branch
    %22 = sbr.rel (0) target = $region21
  $region20: #{plstm_forward.1} parent=0 // pred_region
    _
  $region21: #{plstm_forward.1} parent=0 // pred_fallthru
    _
  // Predicated region
  $region22: #{plstm_forward.1} parent=0 // pred_check
    _
  $region23: #{plstm_forward.1} parent=0 // pred_check_branch
    %24 = sbr.rel (0) target = $region25
  $region24: #{plstm_forward.1} parent=0 // pred_region
    _
  $region25: #{plstm_forward.1} parent=0 // pred_fallthru
    _
  %v25 = vld [vmem:[%s0] sm:$0xff]
  %v26 = vld [vmem:[%s0 + $0x8] sm:$0xff]
  %v27 = vld [vmem:[%s0 + $0x10] sm:$0xff]
  %v28 = vld [vmem:[%s0 + $0x18] sm:$0xff]
  %v29 = vld [vmem:[%s0 + $0x20] sm:$0xff]
  %v30 = vld [vmem:[%s0 + $0x28] sm:$0xff]
  %v31 = vld [vmem:[%s0 + $0x30] sm:$0xff]
  %v32 = vld [vmem:[%s0 + $0x38] sm:$0xff]
  %v33 = vld [vmem:[%s1] sm:$0x3f]
  %v34 = vld [vmem:[%s3] sm:$0x1]
  %v36 = vlaneseq
  %v37 = vshrl.u32 %v36, 7
  %v38 = vsub.s32 0, %v37
  %v39 = vrot.slane %v34, %v38
  %vm41 = vcmask 48128
  %v43 = vsel %vm41, %v25, 0
  %v46 = vsel %vm41, %v26, 0
  %v49 = vsel %vm41, %v27, 0
  %v52 = vsel %vm41, %v28, 0
  %v55 = vsel %vm41, %v29, 0
  %v58 = vsel %vm41, %v30, 0
  %v61 = vsel %vm41, %v31, 0
  %v64 = vsel %vm41, %v32, 0
  %vm66 = vcmask 1045504
  %v68 = vsel %vm66, %v33, 0
  %70 = vmatprep.subr.mxu0 0.0
  %71 = vmatpush1.msra.mxu0 %v68
  %72 = vmatprep.subr.mxu0 0.0
  %73 = vmatpush1.msra.mxu0 0.0
  %74 = vmatprep.subr.mxu0 0.0
  %75 = vmatpush1.msra.mxu0 0.0
  %76 = vmatprep.subr.mxu0 0.0
  %77 = vmatpush1.msra.mxu0 0.0
  %78 = vmatprep.subr.mxu0 0.0
  %79 = vmatpush1.msra.mxu0 0.0
  %80 = vmatprep.subr.mxu0 0.0
  %81 = vmatpush1.msra.mxu0 0.0
  %82 = vmatprep.subr.mxu0 0.0
  %83 = vmatpush1.msra.mxu0 0.0
  %84 = vmatprep.subr.mxu0 0.0
  %85 = vmatpush1.msra.mxu0 0.0
  %86 = vmatprep.subr.mxu0 0.0
  %87 = vmatpush1.msra.mxu0 0.0
  %88 = vmatprep.subr.mxu0 0.0
  %89 = vmatpush1.msra.mxu0 0.0
  %90 = vmatprep.subr.mxu0 0.0
  %91 = vmatpush1.msra.mxu0 0.0
  %92 = vmatprep.subr.mxu0 0.0
  %93 = vmatpush1.msra.mxu0 0.0
  %94 = vmatprep.subr.mxu0 0.0
  %95 = vmatpush1.msra.mxu0 0.0
  %96 = vmatprep.subr.mxu0 0.0
  %97 = vmatpush1.msra.mxu0 0.0
  %98 = vmatprep.subr.mxu0 0.0
  %99 = vmatpush1.msra.mxu0 0.0
  %100 = vmatprep.subr.mxu0 0.0
  %101 = vmatpush1.msra.mxu0 0.0
  %102 = vmatprep.subr.mxu0 0.0
  %103 = vmatpush1.msra.mxu0 0.0
  %104 = vmatprep.subr.mxu0 0.0
  %105 = vmatpush1.msra.mxu0 0.0
  %106 = vmatprep.subr.mxu0 0.0
  %107 = vmatpush1.msra.mxu0 0.0
  %108 = vmatprep.subr.mxu0 0.0
  %109 = vmatpush1.msra.mxu0 0.0
  %110 = vmatprep.subr.mxu0 0.0
  %111 = vmatpush1.msra.mxu0 0.0
  %112 = vmatprep.subr.mxu0 0.0
  %113 = vmatpush1.msra.mxu0 0.0
  %114 = vmatprep.subr.mxu0 0.0
  %115 = vmatpush1.msra.mxu0 0.0
  %116 = vmatprep.subr.mxu0 0.0
  %117 = vmatpush1.msra.mxu0 0.0
  %118 = vmatprep.subr.mxu0 0.0
  %119 = vmatpush1.msra.mxu0 0.0
  %120 = vmatprep.subr.mxu0 0.0
  %121 = vmatpush1.msra.mxu0 0.0
  %122 = vmatprep.subr.mxu0 0.0
  %123 = vmatpush1.msra.mxu0 0.0
  %124 = vmatprep.subr.mxu0 0.0
  %125 = vmatpush1.msra.mxu0 0.0
  %126 = vmatprep.subr.mxu0 0.0
  %127 = vmatpush1.msra.mxu0 0.0
  %128 = vmatprep.subr.mxu0 0.0
  %129 = vmatpush1.msra.mxu0 0.0
  %130 = vmatprep.subr.mxu0 0.0
  %131 = vmatpush1.msra.mxu0 0.0
  %132 = vmatprep.subr.mxu0 0.0
  %133 = vmatpush1.msra.mxu0 0.0
  %134 = vmatprep.mubr.f32.mxu0 0.0
  %135 = vmatmul.mubr.f32.gmra.mrb[0].mxu0 %v43
  %v136 = vpop.f32.mrb[0].mxu0
  %v137 = vadd.f32 %v39, %v136
  %v138 = vpop.f32.mrb[0].mxu0
  %139 = vmatprep.mubr.f32.mxu0 0.0
  %140 = vmatmul.mubr.f32.gmra.mrb[0].mxu0 %v46
  %v141 = vpop.f32.mrb[0].mxu0
  %v142 = vadd.f32 %v39, %v141
  %v143 = vpop.f32.mrb[0].mxu0
  %144 = vmatprep.mubr.f32.mxu0 0.0
  %145 = vmatmul.mubr.f32.gmra.mrb[0].mxu0 %v49
  %v146 = vpop.f32.mrb[0].mxu0
  %v147 = vadd.f32 %v39, %v146
  %v148 = vpop.f32.mrb[0].mxu0
  %149 = vmatprep.mubr.f32.mxu0 0.0
  %150 = vmatmul.mubr.f32.gmra.mrb[0].mxu0 %v52
  %v151 = vpop.f32.mrb[0].mxu0
  %v152 = vadd.f32 %v39, %v151
  %v153 = vpop.f32.mrb[0].mxu0
  %154 = vmatprep.mubr.f32.mxu0 0.0
  %155 = vmatmul.mubr.f32.gmra.mrb[0].mxu0 %v55
  %v156 = vpop.f32.mrb[0].mxu0
  %v157 = vadd.f32 %v39, %v156
  %v158 = vpop.f32.mrb[0].mxu0
  %159 = vmatprep.mubr.f32.mxu0 0.0
  %160 = vmatmul.mubr.f32.gmra.mrb[0].mxu0 %v58
  %v161 = vpop.f32.mrb[0].mxu0
  %v162 = vadd.f32 %v39, %v161
  %v163 = vpop.f32.mrb[0].mxu0
  %164 = vmatprep.mubr.f32.mxu0 0.0
  %165 = vmatmul.mubr.f32.gmra.mrb[0].mxu0 %v61
  %v166 = vpop.f32.mrb[0].mxu0
  %v167 = vadd.f32 %v39, %v166
  %v168 = vpop.f32.mrb[0].mxu0
  %169 = vmatprep.mubr.f32.mxu0 0.0
  %170 = vmatmul.mubr.f32.gmra.mrb[0].mxu0 %v64
  %v171 = vpop.f32.mrb[0].mxu0
  %v172 = vadd.f32 %v39, %v171
  %v173 = vpop.f32.mrb[0].mxu0
  %174 = vdwg.mxu0
  %175 = vst [vmem:[#allocation2] sm:$0xff] %v137
  %176 = vst [vmem:[#allocation2 + $0x8] sm:$0xff] %v142
  %177 = vst [vmem:[#allocation2 + $0x10] sm:$0xff] %v147
  %178 = vst [vmem:[#allocation2 + $0x18] sm:$0xff] %v152
  %179 = vst [vmem:[#allocation2 + $0x20] sm:$0xff] %v157
  %180 = vst [vmem:[#allocation2 + $0x28] sm:$0xff] %v162
  %181 = vst [vmem:[#allocation2 + $0x30] sm:$0xff] %v167
  %182 = vst [vmem:[#allocation2 + $0x38] sm:$0xff] %v172
  %v183 = vld [vmem:[%s2] sm:$0xff]
  %v184 = vld [vmem:[%s2 + $0x8] sm:$0xff]
  %v185 = vld [vmem:[%s2 + $0x10] sm:$0xff]
  %v186 = vld [vmem:[%s2 + $0x18] sm:$0xff]
  %v187 = vld [vmem:[#allocation2] sm:$0xff]
  %v188 = vxor.u32 %v187, 2147483648
  %v189 = vmul.f32 %v188, 1.442695
  %v190 = vpow.pop %v189
  %v191 = vadd.f32 %v190, 1.0
  %v192 = vrcp.pop %v191
  %v193 = vmul.f32 1.0, %v192
  %v194 = vtanh.pop %v187
  %196 = vrot.lane.b32.xlu0 %v194, 64
  %v197 = vpop.permute.xlu0 %196
  %v199 = vmul.f32 %v193, %v197
  %v200 = vtanh.pop %v199
  %202 = vrot.lane.b32.xlu0 %v200, 96
  %v203 = vpop.permute.xlu0 %202
  %v205 = vmul.f32 %v193, %v203
  %v206 = vld [vmem:[#allocation2 + $0x8] sm:$0xff]
  %208 = vrot.lane.b32.xlu0 %v205, 32
  %v209 = vpop.permute.xlu0 %208
  %vm210 = vcmask 261120
  %v211 = vsel %vm210, %v209, 0
  %213 = vmatprep.subr.mxu0 0.0
  %214 = vmatpush1.msra.mxu0 %v183
  %215 = vmatprep.subr.mxu0 0.0
  %216 = vmatpush1.msra.mxu0 %v184
  %217 = vmatprep.subr.mxu0 0.0
  %218 = vmatpush1.msra.mxu0 %v185
  %219 = vmatprep.subr.mxu0 0.0
  %220 = vmatpush1.msra.mxu0 %v186
  %221 = vmatprep.subr.mxu0 0.0
  %222 = vmatpush1.msra.mxu0 0.0
  %223 = vmatprep.subr.mxu0 0.0
  %224 = vmatpush1.msra.mxu0 0.0
  %225 = vmatprep.subr.mxu0 0.0
  %226 = vmatpush1.msra.mxu0 0.0
  %227 = vmatprep.subr.mxu0 0.0
  %228 = vmatpush1.msra.mxu0 0.0
  %229 = vmatprep.subr.mxu0 0.0
  %230 = vmatpush1.msra.mxu0 0.0
  %231 = vmatprep.subr.mxu0 0.0
  %232 = vmatpush1.msra.mxu0 0.0
  %233 = vmatprep.subr.mxu0 0.0
  %234 = vmatpush1.msra.mxu0 0.0
  %235 = vmatprep.subr.mxu0 0.0
  %236 = vmatpush1.msra.mxu0 0.0
  %237 = vmatprep.subr.mxu0 0.0
  %238 = vmatpush1.msra.mxu0 0.0
  %239 = vmatprep.subr.mxu0 0.0
  %240 = vmatpush1.msra.mxu0 0.0
  %241 = vmatprep.subr.mxu0 0.0
  %242 = vmatpush1.msra.mxu0 0.0
  %243 = vmatprep.subr.mxu0 0.0
  %244 = vmatpush1.msra.mxu0 0.0
  %245 = vmatprep.subr.mxu0 0.0
  %246 = vmatpush1.msra.mxu0 0.0
  %247 = vmatprep.subr.mxu0 0.0
  %248 = vmatpush1.msra.mxu0 0.0
  %249 = vmatprep.subr.mxu0 0.0
  %250 = vmatpush1.msra.mxu0 0.0
  %251 = vmatprep.subr.mxu0 0.0
  %252 = vmatpush1.msra.mxu0 0.0
  %253 = vmatprep.subr.mxu0 0.0
  %254 = vmatpush1.msra.mxu0 0.0
  %255 = vmatprep.subr.mxu0 0.0
  %256 = vmatpush1.msra.mxu0 0.0
  %257 = vmatprep.subr.mxu0 0.0
  %258 = vmatpush1.msra.mxu0 0.0
  %259 = vmatprep.subr.mxu0 0.0
  %260 = vmatpush1.msra.mxu0 0.0
  %261 = vmatprep.subr.mxu0 0.0
  %262 = vmatpush1.msra.mxu0 0.0
  %263 = vmatprep.subr.mxu0 0.0
  %264 = vmatpush1.msra.mxu0 0.0
  %265 = vmatprep.subr.mxu0 0.0
  %266 = vmatpush1.msra.mxu0 0.0
  %267 = vmatprep.subr.mxu0 0.0
  %268 = vmatpush1.msra.mxu0 0.0
  %269 = vmatprep.subr.mxu0 0.0
  %270 = vmatpush1.msra.mxu0 0.0
  %271 = vmatprep.subr.mxu0 0.0
  %272 = vmatpush1.msra.mxu0 0.0
  %273 = vmatprep.subr.mxu0 0.0
  %274 = vmatpush1.msra.mxu0 0.0
  %275 = vmatprep.subr.mxu0 0.0
  %276 = vmatpush1.msra.mxu0 0.0
  %277 = vmatprep.mubr.f32.mxu0 0.0
  %278 = vmatmul.mubr.f32.gmra.mrb[0].mxu0 %v211
  %v279 = vpop.f32.mrb[0].mxu0
  %v280 = vadd.f32 %v206, %v279
  %v281 = vpop.f32.mrb[0].mxu0
  %282 = vdwg.mxu0
  %v283 = vxor.u32 %v280, 2147483648
  %v284 = vmul.f32 %v283, 1.442695
  %v285 = vpow.pop %v284
  %v286 = vadd.f32 %v285, 1.0
  %v287 = vrcp.pop %v286
  %v288 = vmul.f32 1.0, %v287
  %v289 = vtanh.pop %v280
  %291 = vrot.lane.b32.xlu0 %v199, 32
  %v292 = vpop.permute.xlu0 %291
  %v294 = vmul.f32 %v288, %v292
  %296 = vrot.lane.b32.xlu0 %v289, 64
  %v297 = vpop.permute.xlu0 %296
  %v299 = vmul.f32 %v288, %v297
  %301 = vrot.lane.b32.xlu0 %v299, 32
  %v302 = vpop.permute.xlu0 %301
  %v304 = vadd.f32 %v294, %v302
  %v305 = vtanh.pop %v304
  %307 = vrot.lane.b32.xlu0 %v305, 64
  %v308 = vpop.permute.xlu0 %307
  %v310 = vmul.f32 %v288, %v308
  %v311 = vld [vmem:[#allocation2 + $0x10] sm:$0xff]
  %313 = vrot.lane.b32.xlu0 %v310, 32
  %v314 = vpop.permute.xlu0 %313
  %v315 = vsel %vm210, %v314, 0
  %317 = vmatprep.subr.mxu0 0.0
  %318 = vmatpush1.msra.mxu0 %v183
  %319 = vmatprep.subr.mxu0 0.0
  %320 = vmatpush1.msra.mxu0 %v184
  %321 = vmatprep.subr.mxu0 0.0
  %322 = vmatpush1.msra.mxu0 %v185
  %323 = vmatprep.subr.mxu0 0.0
  %324 = vmatpush1.msra.mxu0 %v186
  %325 = vmatprep.subr.mxu0 0.0
  %326 = vmatpush1.msra.mxu0 0.0
  %327 = vmatprep.subr.mxu0 0.0
  %328 = vmatpush1.msra.mxu0 0.0
  %329 = vmatprep.subr.mxu0 0.0
  %330 = vmatpush1.msra.mxu0 0.0
  %331 = vmatprep.subr.mxu0 0.0
  %332 = vmatpush1.msra.mxu0 0.0
  %333 = vmatprep.subr.mxu0 0.0
  %334 = vmatpush1.msra.mxu0 0.0
  %335 = vmatprep.subr.mxu0 0.0
  %336 = vmatpush1.msra.mxu0 0.0
  %337 = vmatprep.subr.mxu0 0.0
  %338 = vmatpush1.msra.mxu0 0.0
  %339 = vmatprep.subr.mxu0 0.0
  %340 = vmatpush1.msra.mxu0 0.0
  %341 = vmatprep.subr.mxu0 0.0
  %342 = vmatpush1.msra.mxu0 0.0
  %343 = vmatprep.subr.mxu0 0.0
  %344 = vmatpush1.msra.mxu0 0.0
  %345 = vmatprep.subr.mxu0 0.0
  %346 = vmatpush1.msra.mxu0 0.0
  %347 = vmatprep.subr.mxu0 0.0
  %348 = vmatpush1.msra.mxu0 0.0
  %349 = vmatprep.subr.mxu0 0.0
  %350 = vmatpush1.msra.mxu0 0.0
  %351 = vmatprep.subr.mxu0 0.0
  %352 = vmatpush1.msra.mxu0 0.0
  %353 = vmatprep.subr.mxu0 0.0
  %354 = vmatpush1.msra.mxu0 0.0
  %355 = vmatprep.subr.mxu0 0.0
  %356 = vmatpush1.msra.mxu0 0.0
  %357 = vmatprep.subr.mxu0 0.0
  %358 = vmatpush1.msra.mxu0 0.0
  %359 = vmatprep.subr.mxu0 0.0
  %360 = vmatpush1.msra.mxu0 0.0
  %361 = vmatprep.subr.mxu0 0.0
  %362 = vmatpush1.msra.mxu0 0.0
  %363 = vmatprep.subr.mxu0 0.0
  %364 = vmatpush1.msra.mxu0 0.0
  %365 = vmatprep.subr.mxu0 0.0
  %366 = vmatpush1.msra.mxu0 0.0
  %367 = vmatprep.subr.mxu0 0.0
  %368 = vmatpush1.msra.mxu0 0.0
  %369 = vmatprep.subr.mxu0 0.0
  %370 = vmatpush1.msra.mxu0 0.0
  %371 = vmatprep.subr.mxu0 0.0
  %372 = vmatpush1.msra.mxu0 0.0
  %373 = vmatprep.subr.mxu0 0.0
  %374 = vmatpush1.msra.mxu0 0.0
  %375 = vmatprep.subr.mxu0 0.0
  %376 = vmatpush1.msra.mxu0 0.0
  %377 = vmatprep.subr.mxu0 0.0
  %378 = vmatpush1.msra.mxu0 0.0
  %379 = vmatprep.subr.mxu0 0.0
  %380 = vmatpush1.msra.mxu0 0.0
  %381 = vmatprep.mubr.f32.mxu0 0.0
  %382 = vmatmul.mubr.f32.gmra.mrb[0].mxu0 %v315
  %v383 = vpop.f32.mrb[0].mxu0
  %v384 = vadd.f32 %v311, %v383
  %v385 = vpop.f32.mrb[0].mxu0
  %386 = vdwg.mxu0
  %v387 = vxor.u32 %v384, 2147483648
  %v388 = vmul.f32 %v387, 1.442695
  %v389 = vpow.pop %v388
  %v390 = vadd.f32 %v389, 1.0
  %v391 = vrcp.pop %v390
  %v392 = vmul.f32 1.0, %v391
  %v393 = vtanh.pop %v384
  %v394 = vmul.f32 %v392, %v304
  %396 = vrot.lane.b32.xlu0 %v393, 64
  %v397 = vpop.permute.xlu0 %396
  %v399 = vmul.f32 %v392, %v397
  %401 = vrot.lane.b32.xlu0 %v399, 32
  %v402 = vpop.permute.xlu0 %401
  %v404 = vadd.f32 %v394, %v402
  %v405 = vtanh.pop %v404
  %407 = vrot.lane.b32.xlu0 %v405, 64
  %v408 = vpop.permute.xlu0 %407
  %v410 = vmul.f32 %v392, %v408
  %v411 = vld [vmem:[#allocation2 + $0x18] sm:$0xff]
  %413 = vrot.lane.b32.xlu0 %v410, 32
  %v414 = vpop.permute.xlu0 %413
  %v415 = vsel %vm210, %v414, 0
  %417 = vmatprep.subr.mxu0 0.0
  %418 = vmatpush1.msra.mxu0 %v183
  %419 = vmatprep.subr.mxu0 0.0
  %420 = vmatpush1.msra.mxu0 %v184
  %421 = vmatprep.subr.mxu0 0.0
  %422 = vmatpush1.msra.mxu0 %v185
  %423 = vmatprep.subr.mxu0 0.0
  %424 = vmatpush1.msra.mxu0 %v186
  %425 = vmatprep.subr.mxu0 0.0
  %426 = vmatpush1.msra.mxu0 0.0
  %427 = vmatprep.subr.mxu0 0.0
  %428 = vmatpush1.msra.mxu0 0.0
  %429 = vmatprep.subr.mxu0 0.0
  %430 = vmatpush1.msra.mxu0 0.0
  %431 = vmatprep.subr.mxu0 0.0
  %432 = vmatpush1.msra.mxu0 0.0
  %433 = vmatprep.subr.mxu0 0.0
  %434 = vmatpush1.msra.mxu0 0.0
  %435 = vmatprep.subr.mxu0 0.0
  %436 = vmatpush1.msra.mxu0 0.0
  %437 = vmatprep.subr.mxu0 0.0
  %438 = vmatpush1.msra.mxu0 0.0
  %439 = vmatprep.subr.mxu0 0.0
  %440 = vmatpush1.msra.mxu0 0.0
  %441 = vmatprep.subr.mxu0 0.0
  %442 = vmatpush1.msra.mxu0 0.0
  %443 = vmatprep.subr.mxu0 0.0
  %444 = vmatpush1.msra.mxu0 0.0
  %445 = vmatprep.subr.mxu0 0.0
  %446 = vmatpush1.msra.mxu0 0.0
  %447 = vmatprep.subr.mxu0 0.0
  %448 = vmatpush1.msra.mxu0 0.0
  %449 = vmatprep.subr.mxu0 0.0
  %450 = vmatpush1.msra.mxu0 0.0
  %451 = vmatprep.subr.mxu0 0.0
  %452 = vmatpush1.msra.mxu0 0.0
  %453 = vmatprep.subr.mxu0 0.0
  %454 = vmatpush1.msra.mxu0 0.0
  %455 = vmatprep.subr.mxu0 0.0
  %456 = vmatpush1.msra.mxu0 0.0
  %457 = vmatprep.subr.mxu0 0.0
  %458 = vmatpush1.msra.mxu0 0.0
  %459 = vmatprep.subr.mxu0 0.0
  %460 = vmatpush1.msra.mxu0 0.0
  %461 = vmatprep.subr.mxu0 0.0
  %462 = vmatpush1.msra.mxu0 0.0
  %463 = vmatprep.subr.mxu0 0.0
  %464 = vmatpush1.msra.mxu0 0.0
  %465 = vmatprep.subr.mxu0 0.0
  %466 = vmatpush1.msra.mxu0 0.0
  %467 = vmatprep.subr.mxu0 0.0
  %468 = vmatpush1.msra.mxu0 0.0
  %469 = vmatprep.subr.mxu0 0.0
  %470 = vmatpush1.msra.mxu0 0.0
  %471 = vmatprep.subr.mxu0 0.0
  %472 = vmatpush1.msra.mxu0 0.0
  %473 = vmatprep.subr.mxu0 0.0
  %474 = vmatpush1.msra.mxu0 0.0
  %475 = vmatprep.subr.mxu0 0.0
  %476 = vmatpush1.msra.mxu0 0.0
  %477 = vmatprep.subr.mxu0 0.0
  %478 = vmatpush1.msra.mxu0 0.0
  %479 = vmatprep.subr.mxu0 0.0
  %480 = vmatpush1.msra.mxu0 0.0
  %481 = vmatprep.mubr.f32.mxu0 0.0
  %482 = vmatmul.mubr.f32.gmra.mrb[0].mxu0 %v415
  %v483 = vpop.f32.mrb[0].mxu0
  %v484 = vadd.f32 %v411, %v483
  %v485 = vpop.f32.mrb[0].mxu0
  %486 = vdwg.mxu0
  %v487 = vxor.u32 %v484, 2147483648
  %v488 = vmul.f32 %v487, 1.442695
  %v489 = vpow.pop %v488
  %v490 = vadd.f32 %v489, 1.0
  %v491 = vrcp.pop %v490
  %v492 = vmul.f32 1.0, %v491
  %v493 = vtanh.pop %v484
  %v494 = vmul.f32 %v492, %v404
  %496 = vrot.lane.b32.xlu0 %v493, 64
  %v497 = vpop.permute.xlu0 %496
  %v499 = vmul.f32 %v492, %v497
  %501 = vrot.lane.b32.xlu0 %v499, 32
  %v502 = vpop.permute.xlu0 %501
  %v504 = vadd.f32 %v494, %v502
  %v505 = vtanh.pop %v504
  %507 = vrot.lane.b32.xlu0 %v505, 64
  %v508 = vpop.permute.xlu0 %507
  %v510 = vmul.f32 %v492, %v508
  %v511 = vld [vmem:[#allocation2 + $0x20] sm:$0xff]
  %513 = vrot.lane.b32.xlu0 %v510, 32
  %v514 = vpop.permute.xlu0 %513
  %v515 = vsel %vm210, %v514, 0
  %517 = vmatprep.subr.mxu0 0.0
  %518 = vmatpush1.msra.mxu0 %v183
  %519 = vmatprep.subr.mxu0 0.0
  %520 = vmatpush1.msra.mxu0 %v184
  %521 = vmatprep.subr.mxu0 0.0
  %522 = vmatpush1.msra.mxu0 %v185
  %523 = vmatprep.subr.mxu0 0.0
  %524 = vmatpush1.msra.mxu0 %v186
  %525 = vmatprep.subr.mxu0 0.0
  %526 = vmatpush1.msra.mxu0 0.0
  %527 = vmatprep.subr.mxu0 0.0
  %528 = vmatpush1.msra.mxu0 0.0
  %529 = vmatprep.subr.mxu0 0.0
  %530 = vmatpush1.msra.mxu0 0.0
  %531 = vmatprep.subr.mxu0 0.0
  %532 = vmatpush1.msra.mxu0 0.0
  %533 = vmatprep.subr.mxu0 0.0
  %534 = vmatpush1.msra.mxu0 0.0
  %535 = vmatprep.subr.mxu0 0.0
  %536 = vmatpush1.msra.mxu0 0.0
  %537 = vmatprep.subr.mxu0 0.0
  %538 = vmatpush1.msra.mxu0 0.0
  %539 = vmatprep.subr.mxu0 0.0
  %540 = vmatpush1.msra.mxu0 0.0
  %541 = vmatprep.subr.mxu0 0.0
  %542 = vmatpush1.msra.mxu0 0.0
  %543 = vmatprep.subr.mxu0 0.0
  %544 = vmatpush1.msra.mxu0 0.0
  %545 = vmatprep.subr.mxu0 0.0
  %546 = vmatpush1.msra.mxu0 0.0
  %547 = vmatprep.subr.mxu0 0.0
  %548 = vmatpush1.msra.mxu0 0.0
  %549 = vmatprep.subr.mxu0 0.0
  %550 = vmatpush1.msra.mxu0 0.0
  %551 = vmatprep.subr.mxu0 0.0
  %552 = vmatpush1.msra.mxu0 0.0
  %553 = vmatprep.subr.mxu0 0.0
  %554 = vmatpush1.msra.mxu0 0.0
  %555 = vmatprep.subr.mxu0 0.0
  %556 = vmatpush1.msra.mxu0 0.0
  %557 = vmatprep.subr.mxu0 0.0
  %558 = vmatpush1.msra.mxu0 0.0
  %559 = vmatprep.subr.mxu0 0.0
  %560 = vmatpush1.msra.mxu0 0.0
  %561 = vmatprep.subr.mxu0 0.0
  %562 = vmatpush1.msra.mxu0 0.0
  %563 = vmatprep.subr.mxu0 0.0
  %564 = vmatpush1.msra.mxu0 0.0
  %565 = vmatprep.subr.mxu0 0.0
  %566 = vmatpush1.msra.mxu0 0.0
  %567 = vmatprep.subr.mxu0 0.0
  %568 = vmatpush1.msra.mxu0 0.0
  %569 = vmatprep.subr.mxu0 0.0
  %570 = vmatpush1.msra.mxu0 0.0
  %571 = vmatprep.subr.mxu0 0.0
  %572 = vmatpush1.msra.mxu0 0.0
  %573 = vmatprep.subr.mxu0 0.0
  %574 = vmatpush1.msra.mxu0 0.0
  %575 = vmatprep.subr.mxu0 0.0
  %576 = vmatpush1.msra.mxu0 0.0
  %577 = vmatprep.subr.mxu0 0.0
  %578 = vmatpush1.msra.mxu0 0.0
  %579 = vmatprep.subr.mxu0 0.0
  %580 = vmatpush1.msra.mxu0 0.0
  %581 = vmatprep.mubr.f32.mxu0 0.0
  %582 = vmatmul.mubr.f32.gmra.mrb[0].mxu0 %v515
  %v583 = vpop.f32.mrb[0].mxu0
  %v584 = vadd.f32 %v511, %v583
  %v585 = vpop.f32.mrb[0].mxu0
  %586 = vdwg.mxu0
  %v587 = vxor.u32 %v584, 2147483648
  %v588 = vmul.f32 %v587, 1.442695
  %v589 = vpow.pop %v588
  %v590 = vadd.f32 %v589, 1.0
  %v591 = vrcp.pop %v590
  %v592 = vmul.f32 1.0, %v591
  %v593 = vtanh.pop %v584
  %v594 = vmul.f32 %v592, %v504
  %596 = vrot.lane.b32.xlu0 %v593, 64
  %v597 = vpop.permute.xlu0 %596
  %v599 = vmul.f32 %v592, %v597
  %601 = vrot.lane.b32.xlu0 %v599, 32
  %v602 = vpop.permute.xlu0 %601
  %v604 = vadd.f32 %v594, %v602
  %v605 = vtanh.pop %v604
  %607 = vrot.lane.b32.xlu0 %v605, 64
  %v608 = vpop.permute.xlu0 %607
  %v610 = vmul.f32 %v592, %v608
  %v611 = vld [vmem:[#allocation2 + $0x28] sm:$0xff]
  %613 = vrot.lane.b32.xlu0 %v610, 32
  %v614 = vpop.permute.xlu0 %613
  %v615 = vsel %vm210, %v614, 0
  %617 = vmatprep.subr.mxu0 0.0
  %618 = vmatpush1.msra.mxu0 %v183
  %619 = vmatprep.subr.mxu0 0.0
  %620 = vmatpush1.msra.mxu0 %v184
  %621 = vmatprep.subr.mxu0 0.0
  %622 = vmatpush1.msra.mxu0 %v185
  %623 = vmatprep.subr.mxu0 0.0
  %624 = vmatpush1.msra.mxu0 %v186
  %625 = vmatprep.subr.mxu0 0.0
  %626 = vmatpush1.msra.mxu0 0.0
  %627 = vmatprep.subr.mxu0 0.0
  %628 = vmatpush1.msra.mxu0 0.0
  %629 = vmatprep.subr.mxu0 0.0
  %630 = vmatpush1.msra.mxu0 0.0
  %631 = vmatprep.subr.mxu0 0.0
  %632 = vmatpush1.msra.mxu0 0.0
  %633 = vmatprep.subr.mxu0 0.0
  %634 = vmatpush1.msra.mxu0 0.0
  %635 = vmatprep.subr.mxu0 0.0
  %636 = vmatpush1.msra.mxu0 0.0
  %637 = vmatprep.subr.mxu0 0.0
  %638 = vmatpush1.msra.mxu0 0.0
  %639 = vmatprep.subr.mxu0 0.0
  %640 = vmatpush1.msra.mxu0 0.0
  %641 = vmatprep.subr.mxu0 0.0
  %642 = vmatpush1.msra.mxu0 0.0
  %643 = vmatprep.subr.mxu0 0.0
  %644 = vmatpush1.msra.mxu0 0.0
  %645 = vmatprep.subr.mxu0 0.0
  %646 = vmatpush1.msra.mxu0 0.0
  %647 = vmatprep.subr.mxu0 0.0
  %648 = vmatpush1.msra.mxu0 0.0
  %649 = vmatprep.subr.mxu0 0.0
  %650 = vmatpush1.msra.mxu0 0.0
  %651 = vmatprep.subr.mxu0 0.0
  %652 = vmatpush1.msra.mxu0 0.0
  %653 = vmatprep.subr.mxu0 0.0
  %654 = vmatpush1.msra.mxu0 0.0
  %655 = vmatprep.subr.mxu0 0.0
  %656 = vmatpush1.msra.mxu0 0.0
  %657 = vmatprep.subr.mxu0 0.0
  %658 = vmatpush1.msra.mxu0 0.0
  %659 = vmatprep.subr.mxu0 0.0
  %660 = vmatpush1.msra.mxu0 0.0
  %661 = vmatprep.subr.mxu0 0.0
  %662 = vmatpush1.msra.mxu0 0.0
  %663 = vmatprep.subr.mxu0 0.0
  %664 = vmatpush1.msra.mxu0 0.0
  %665 = vmatprep.subr.mxu0 0.0
  %666 = vmatpush1.msra.mxu0 0.0
  %667 = vmatprep.subr.mxu0 0.0
  %668 = vmatpush1.msra.mxu0 0.0
  %669 = vmatprep.subr.mxu0 0.0
  %670 = vmatpush1.msra.mxu0 0.0
  %671 = vmatprep.subr.mxu0 0.0
  %672 = vmatpush1.msra.mxu0 0.0
  %673 = vmatprep.subr.mxu0 0.0
  %674 = vmatpush1.msra.mxu0 0.0
  %675 = vmatprep.subr.mxu0 0.0
  %676 = vmatpush1.msra.mxu0 0.0
  %677 = vmatprep.subr.mxu0 0.0
  %678 = vmatpush1.msra.mxu0 0.0
  %679 = vmatprep.subr.mxu0 0.0
  %680 = vmatpush1.msra.mxu0 0.0
  %681 = vmatprep.mubr.f32.mxu0 0.0
  %682 = vmatmul.mubr.f32.gmra.mrb[0].mxu0 %v615
  %v683 = vpop.f32.mrb[0].mxu0
  %v684 = vadd.f32 %v611, %v683
  %v685 = vpop.f32.mrb[0].mxu0
  %686 = vdwg.mxu0
  %v687 = vxor.u32 %v684, 2147483648
  %v688 = vmul.f32 %v687, 1.442695
  %v689 = vpow.pop %v688
  %v690 = vadd.f32 %v689, 1.0
  %v691 = vrcp.pop %v690
  %v692 = vmul.f32 1.0, %v691
  %v693 = vtanh.pop %v684
  %v694 = vmul.f32 %v692, %v604
  %696 = vrot.lane.b32.xlu0 %v693, 64
  %v697 = vpop.permute.xlu0 %696
  %v699 = vmul.f32 %v692, %v697
  %701 = vrot.lane.b32.xlu0 %v699, 32
  %v702 = vpop.permute.xlu0 %701
  %v704 = vadd.f32 %v694, %v702
  %v705 = vtanh.pop %v704
  %707 = vrot.lane.b32.xlu0 %v705, 64
  %v708 = vpop.permute.xlu0 %707
  %v710 = vmul.f32 %v692, %v708
  %v711 = vld [vmem:[#allocation2 + $0x30] sm:$0xff]
  %713 = vrot.lane.b32.xlu0 %v710, 32
  %v714 = vpop.permute.xlu0 %713
  %v715 = vsel %vm210, %v714, 0
  %717 = vmatprep.subr.mxu0 0.0
  %718 = vmatpush1.msra.mxu0 %v183
  %719 = vmatprep.subr.mxu0 0.0
  %720 = vmatpush1.msra.mxu0 %v184
  %721 = vmatprep.subr.mxu0 0.0
  %722 = vmatpush1.msra.mxu0 %v185
  %723 = vmatprep.subr.mxu0 0.0
  %724 = vmatpush1.msra.mxu0 %v186
  %725 = vmatprep.subr.mxu0 0.0
  %726 = vmatpush1.msra.mxu0 0.0
  %727 = vmatprep.subr.mxu0 0.0
  %728 = vmatpush1.msra.mxu0 0.0
  %729 = vmatprep.subr.mxu0 0.0
  %730 = vmatpush1.msra.mxu0 0.0
  %731 = vmatprep.subr.mxu0 0.0
  %732 = vmatpush1.msra.mxu0 0.0
  %733 = vmatprep.subr.mxu0 0.0
  %734 = vmatpush1.msra.mxu0 0.0
  %735 = vmatprep.subr.mxu0 0.0
  %736 = vmatpush1.msra.mxu0 0.0
  %737 = vmatprep.subr.mxu0 0.0
  %738 = vmatpush1.msra.mxu0 0.0
  %739 = vmatprep.subr.mxu0 0.0
  %740 = vmatpush1.msra.mxu0 0.0
  %741 = vmatprep.subr.mxu0 0.0
  %742 = vmatpush1.msra.mxu0 0.0
  %743 = vmatprep.subr.mxu0 0.0
  %744 = vmatpush1.msra.mxu0 0.0
  %745 = vmatprep.subr.mxu0 0.0
  %746 = vmatpush1.msra.mxu0 0.0
  %747 = vmatprep.subr.mxu0 0.0
  %748 = vmatpush1.msra.mxu0 0.0
  %749 = vmatprep.subr.mxu0 0.0
  %750 = vmatpush1.msra.mxu0 0.0
  %751 = vmatprep.subr.mxu0 0.0
  %752 = vmatpush1.msra.mxu0 0.0
  %753 = vmatprep.subr.mxu0 0.0
  %754 = vmatpush1.msra.mxu0 0.0
  %755 = vmatprep.subr.mxu0 0.0
  %756 = vmatpush1.msra.mxu0 0.0
  %757 = vmatprep.subr.mxu0 0.0
  %758 = vmatpush1.msra.mxu0 0.0
  %759 = vmatprep.subr.mxu0 0.0
  %760 = vmatpush1.msra.mxu0 0.0
  %761 = vmatprep.subr.mxu0 0.0
  %762 = vmatpush1.msra.mxu0 0.0
  %763 = vmatprep.subr.mxu0 0.0
  %764 = vmatpush1.msra.mxu0 0.0
  %765 = vmatprep.subr.mxu0 0.0
  %766 = vmatpush1.msra.mxu0 0.0
  %767 = vmatprep.subr.mxu0 0.0
  %768 = vmatpush1.msra.mxu0 0.0
  %769 = vmatprep.subr.mxu0 0.0
  %770 = vmatpush1.msra.mxu0 0.0
  %771 = vmatprep.subr.mxu0 0.0
  %772 = vmatpush1.msra.mxu0 0.0
  %773 = vmatprep.subr.mxu0 0.0
  %774 = vmatpush1.msra.mxu0 0.0
  %775 = vmatprep.subr.mxu0 0.0
  %776 = vmatpush1.msra.mxu0 0.0
  %777 = vmatprep.subr.mxu0 0.0
  %778 = vmatpush1.msra.mxu0 0.0
  %779 = vmatprep.subr.mxu0 0.0
  %780 = vmatpush1.msra.mxu0 0.0
  %781 = vmatprep.mubr.f32.mxu0 0.0
  %782 = vmatmul.mubr.f32.gmra.mrb[0].mxu0 %v715
  %v783 = vpop.f32.mrb[0].mxu0
  %v784 = vadd.f32 %v711, %v783
  %v785 = vpop.f32.mrb[0].mxu0
  %786 = vdwg.mxu0
  %v787 = vxor.u32 %v784, 2147483648
  %v788 = vmul.f32 %v787, 1.442695
  %v789 = vpow.pop %v788
  %v790 = vadd.f32 %v789, 1.0
  %v791 = vrcp.pop %v790
  %v792 = vmul.f32 1.0, %v791
  %v793 = vtanh.pop %v784
  %v794 = vmul.f32 %v792, %v704
  %796 = vrot.lane.b32.xlu0 %v793, 64
  %v797 = vpop.permute.xlu0 %796
  %v799 = vmul.f32 %v792, %v797
  %801 = vrot.lane.b32.xlu0 %v799, 32
  %v802 = vpop.permute.xlu0 %801
  %v804 = vadd.f32 %v794, %v802
  %v805 = vtanh.pop %v804
  %807 = vrot.lane.b32.xlu0 %v805, 64
  %v808 = vpop.permute.xlu0 %807
  %v810 = vmul.f32 %v792, %v808
  %v811 = vld [vmem:[#allocation2 + $0x38] sm:$0xff]
  %813 = vrot.lane.b32.xlu0 %v810, 32
  %v814 = vpop.permute.xlu0 %813
  %v815 = vsel %vm210, %v814, 0
  %817 = vmatprep.subr.mxu0 0.0
  %818 = vmatpush1.msra.mxu0 %v183
  %819 = vmatprep.subr.mxu0 0.0
  %820 = vmatpush1.msra.mxu0 %v184
  %821 = vmatprep.subr.mxu0 0.0
  %822 = vmatpush1.msra.mxu0 %v185
  %823 = vmatprep.subr.mxu0 0.0
  %824 = vmatpush1.msra.mxu0 %v186
  %825 = vmatprep.subr.mxu0 0.0
  %826 = vmatpush1.msra.mxu0 0.0
  %827 = vmatprep.subr.mxu0 0.0
  %828 = vmatpush1.msra.mxu0 0.0
  %829 = vmatprep.subr.mxu0 0.0
  %830 = vmatpush1.msra.mxu0 0.0
  %831 = vmatprep.subr.mxu0 0.0
  %832 = vmatpush1.msra.mxu0 0.0
  %833 = vmatprep.subr.mxu0 0.0
  %834 = vmatpush1.msra.mxu0 0.0
  %835 = vmatprep.subr.mxu0 0.0
  %836 = vmatpush1.msra.mxu0 0.0
  %837 = vmatprep.subr.mxu0 0.0
  %838 = vmatpush1.msra.mxu0 0.0
  %839 = vmatprep.subr.mxu0 0.0
  %840 = vmatpush1.msra.mxu0 0.0
  %841 = vmatprep.subr.mxu0 0.0
  %842 = vmatpush1.msra.mxu0 0.0
  %843 = vmatprep.subr.mxu0 0.0
  %844 = vmatpush1.msra.mxu0 0.0
  %845 = vmatprep.subr.mxu0 0.0
  %846 = vmatpush1.msra.mxu0 0.0
  %847 = vmatprep.subr.mxu0 0.0
  %848 = vmatpush1.msra.mxu0 0.0
  %849 = vmatprep.subr.mxu0 0.0
  %850 = vmatpush1.msra.mxu0 0.0
  %851 = vmatprep.subr.mxu0 0.0
  %852 = vmatpush1.msra.mxu0 0.0
  %853 = vmatprep.subr.mxu0 0.0
  %854 = vmatpush1.msra.mxu0 0.0
  %855 = vmatprep.subr.mxu0 0.0
  %856 = vmatpush1.msra.mxu0 0.0
  %857 = vmatprep.subr.mxu0 0.0
  %858 = vmatpush1.msra.mxu0 0.0
  %859 = vmatprep.subr.mxu0 0.0
  %860 = vmatpush1.msra.mxu0 0.0
  %861 = vmatprep.subr.mxu0 0.0
  %862 = vmatpush1.msra.mxu0 0.0
  %863 = vmatprep.subr.mxu0 0.0
  %864 = vmatpush1.msra.mxu0 0.0
  %865 = vmatprep.subr.mxu0 0.0
  %866 = vmatpush1.msra.mxu0 0.0
  %867 = vmatprep.subr.mxu0 0.0
  %868 = vmatpush1.msra.mxu0 0.0
  %869 = vmatprep.subr.mxu0 0.0
  %870 = vmatpush1.msra.mxu0 0.0
  %871 = vmatprep.subr.mxu0 0.0
  %872 = vmatpush1.msra.mxu0 0.0
  %873 = vmatprep.subr.mxu0 0.0
  %874 = vmatpush1.msra.mxu0 0.0
  %875 = vmatprep.subr.mxu0 0.0
  %876 = vmatpush1.msra.mxu0 0.0
  %877 = vmatprep.subr.mxu0 0.0
  %878 = vmatpush1.msra.mxu0 0.0
  %879 = vmatprep.subr.mxu0 0.0
  %880 = vmatpush1.msra.mxu0 0.0
  %881 = vmatprep.mubr.f32.mxu0 0.0
  %882 = vmatmul.mubr.f32.gmra.mrb[0].mxu0 %v815
  %v883 = vpop.f32.mrb[0].mxu0
  %v884 = vadd.f32 %v811, %v883
  %v885 = vpop.f32.mrb[0].mxu0
  %886 = vdwg.mxu0
  %v887 = vxor.u32 %v884, 2147483648
  %v888 = vmul.f32 %v887, 1.442695
  %v889 = vpow.pop %v888
  %v890 = vadd.f32 %v889, 1.0
  %v891 = vrcp.pop %v890
  %v892 = vmul.f32 1.0, %v891
  %v893 = vtanh.pop %v884
  %v894 = vmul.f32 %v892, %v804
  %896 = vrot.lane.b32.xlu0 %v893, 64
  %v897 = vpop.permute.xlu0 %896
  %v899 = vmul.f32 %v892, %v897
  %901 = vrot.lane.b32.xlu0 %v899, 32
  %v902 = vpop.permute.xlu0 %901
  %v904 = vadd.f32 %v894, %v902
  %v905 = vtanh.pop %v904
  %907 = vrot.lane.b32.xlu0 %v905, 64
  %v908 = vpop.permute.xlu0 %907
  %v910 = vmul.f32 %v892, %v908
  %v911 = vld [vmem:[%s4] sm:$0x1]
  %v913 = vlaneseq
  %v914 = vshrl.u32 %v913, 7
  %v915 = vsub.s32 0, %v914
  %v916 = vrot.slane %v911, %v915
  %917 = vrot.lane.b32.xlu0 %v916, 96
  %v918 = vpop.permute.xlu0 %917
  %v920 = vmul.f32 %v910, %v918
  %922 = vrot.lane.b32.xlu0 %v920, 32
  %v923 = vpop.permute.xlu0 %922
  %v925 = vsel %vm210, %v923, 0.0
  %926 = vadd.xlane.f32.xlu0 %v925
  %v927 = vpop.xlane.xlu0 %926
  %v928 = vld [vmem:[#allocation3] sm:$0x1]
  %v930 = vlaneseq
  %v931 = vshrl.u32 %v930, 7
  %v932 = vsub.s32 0, %v931
  %v933 = vrot.slane %v928, %v932
  %v935 = vadd.f32 %v927, %v933
  %vm936 = vcmask 1024
  %937 = vst.msk [vmem:[%s6] sm:$0x3] %vm936, %v935
  // Predicated region
  $region26: #{plstm_forward.1} parent=0 // pred_check
    _
  $region27: #{plstm_forward.1} parent=0 // pred_check_branch
    %939 = sbr.rel (0) target = $region29
  $region28: #{plstm_forward.1} parent=0 // pred_region
    _
  $region29: #{plstm_forward.1} parent=0 // pred_fallthru
    _
  // Predicated region
  $region30: #{plstm_forward.1} parent=0 // pred_check
    _
  $region31: #{plstm_forward.1} parent=0 // pred_check_branch
    %941 = sbr.rel (0) target = $region33
  $region32: #{plstm_forward.1} parent=0 // pred_region
    _
  $region33: #{plstm_forward.1} parent=0 // pred_fallthru
    _

</llo_original>
